<compile_context>
chip_gen: v7x
topology: tpu7x:2x2x1
jax: 0.10.0
libtpu: 0.0.40
codegen_flags: <defaults>
</compile_context>

<pallas_src>
import functools

import numpy as np
import jax
import jax.numpy as jnp
from jax import lax
from jax.experimental import pallas as pl
from jax.experimental.pallas import tpu as pltpu


# ----------------------------------------------------------------------------
# Deterministic parameter construction (mirrors SobelConv2d.__init__)
# ----------------------------------------------------------------------------
def make_sobel_weight(out_channels, in_per_group, kernel_size):
    """Returns weight in PyTorch OIHW layout: (Cout, Cin/groups, K, K)."""
    k = kernel_size
    mid = k // 2
    w = np.zeros((out_channels, in_per_group, k, k), dtype=np.float32)
    for idx in range(out_channels):
        if idx % 4 == 0:
            w[idx, :, 0, :] = -1
            w[idx, :, 0, mid] = -2
            w[idx, :, -1, :] = 1
            w[idx, :, -1, mid] = 2
        elif idx % 4 == 1:
            w[idx, :, :, 0] = -1
            w[idx, :, mid, 0] = -2
            w[idx, :, :, -1] = 1
            w[idx, :, mid, -1] = 2
        elif idx % 4 == 2:
            w[idx, :, 0, 0] = -2
            for i in range(0, mid + 1):
                w[idx, :, mid - i, i] = -1
                w[idx, :, k - 1 - i, mid + i] = 1
            w[idx, :, -1, -1] = 2
        else:
            w[idx, :, -1, 0] = -2
            for i in range(0, mid + 1):
                w[idx, :, mid + i, i] = -1
                w[idx, :, i, mid + i] = 1
            w[idx, :, 0, -1] = 2
    return w


# ----------------------------------------------------------------------------
# One-time packed-weight build (hoisted out of the per-call path).
# Rebuild only when (sobel_weight, sobel_factor, bias, W, padding) change.
# ----------------------------------------------------------------------------
def build_sobel_packed_weight(sobel_weight_oihw, sobel_factor, bias, *,
                              width, kernel_size, padding):
    """Packed GEMM weight of shape (KH*Wp*Cin + 1, Wo*Cout).

    T[kh*Wp*Cin + wp*Cin + ci, wo*Cout + co] = (W*factor)[co, ci, kh, wp-wo]
    for 0 <= wp-wo < KW (else 0); last row is the bias tiled over wo.
    """
    Cout, Cin, KH, KW = sobel_weight_oihw.shape
    assert KH == KW == kernel_size
    Wp = width + 2 * padding
    Wo = Wp - KW + 1

    # sobel_weight * sobel_factor (factor shape (Cout,1,1,1)); OIHW -> HWIO.
    w_scaled = (sobel_weight_oihw * sobel_factor).astype(jnp.float32)
    w_hwio = jnp.transpose(w_scaled, (2, 3, 1, 0))          # (KH, KW, Cin, Cout)

    # Width shift matrices (static, numpy).
    M = np.zeros((KW, Wp, Wo), dtype=np.float32)
    for kw in range(KW):
        for wo in range(Wo):
            M[kw, wo + kw, wo] = 1.0
    M = jnp.asarray(M)

    # T[kh] = sum_kw kron(shift_kw, w_hwio[kh, kw])  -> (KH, Wp*Cin, Wo*Cout)
    T = jnp.stack([
        sum(jnp.kron(M[kw], w_hwio[kh, kw]) for kw in range(KW))
        for kh in range(KH)
    ])
    T_flat = T.reshape(KH * Wp * Cin, Wo * Cout)

    # Bias folded as an extra contraction row (pairs with a ones-column on x).
    b_row = jnp.tile(bias.astype(jnp.float32), Wo).reshape(1, Wo * Cout)
    return jnp.concatenate([T_flat, b_row], axis=0)         # (KH*Wp*Cin + 1, Wo*Cout)


# ----------------------------------------------------------------------------
# Pallas kernel: one MXU dot per batch image. T is grid-invariant (VMEM-resident).
# ----------------------------------------------------------------------------
def _sobel_gemm_kernel(x_ref, t_ref, o_ref):
    # x_ref: (1, Ho, K)    height-im2row'ed padded image (+ ones column for bias)
    # t_ref: (K, Wo*Cout)  packed block-Toeplitz sobel weight + bias row
    # o_ref: (1, Ho, Wo*Cout)  lane-dense output slab (last dim multiple of 128)
    o_ref[0] = jnp.dot(x_ref[0], t_ref[...],
                       preferred_element_type=jnp.float32).astype(o_ref.dtype)


@functools.partial(jax.jit, static_argnames=("out_channels", "kernel_size", "padding"))
def sobel_conv2d_forward(x_nchw, t_packed, *, out_channels, kernel_size, padding):
    """Forward of SobelConv2d (stride=1, dilation=1, groups=1). Returns NCHW."""
    N, Cin, H, W = x_nchw.shape
    KH = KW = kernel_size
    Hp, Wp = H + 2 * padding, W + 2 * padding
    Ho, Wo = Hp - KH + 1, Wp - KW + 1
    WpC = Wp * Cin
    WoC = Wo * out_channels
    K = KH * WpC + 1
    assert t_packed.shape == (K, WoC), "packed weight was built for a different W/padding"

    # NCHW -> padded NHWC -> (N, Hp, Wp*Cin): W and Cin fused into the lane dim.
    # TODO(synk): if the surrounding model is NHWC end-to-end, both transposes
    # (here and on the output) can be dropped — they are pure HBM relayouts.
    x_nhwc = jnp.transpose(x_nchw, (0, 2, 3, 1)).astype(jnp.float32)
    x_pad = jnp.pad(x_nhwc, ((0, 0), (padding, padding), (padding, padding), (0, 0)))
    x_flat = x_pad.reshape(N, Hp, WpC)

    # Height im2row in the wrapper (fuses under jit): (N, Ho, KH*WpC), then a
    # ones-column so the bias row of T is picked up by the same dot.
    x_rows = jnp.concatenate([x_flat[:, kh:kh + Ho, :] for kh in range(KH)], axis=-1)
    x_rows = jnp.concatenate(
        [x_rows, jnp.ones((N, Ho, 1), dtype=jnp.float32)], axis=-1)     # (N, Ho, K)

    out_flat = pl.pallas_call(
        _sobel_gemm_kernel,
        out_shape=jax.ShapeDtypeStruct((N, Ho, WoC), jnp.float32),
        grid_spec=pltpu.PrefetchScalarGridSpec(
            num_scalar_prefetch=0,
            grid=(N,),                                     # batch-parallel (both v7x TCs)
            in_specs=[
                pl.BlockSpec((1, Ho, K), lambda n: (n, 0, 0)),
                pl.BlockSpec((K, WoC), lambda n: (0, 0)),  # grid-invariant -> stays in VMEM
            ],
            out_specs=pl.BlockSpec((1, Ho, WoC), lambda n: (n, 0, 0)),
        ),
        compiler_params=pltpu.CompilerParams(
            dimension_semantics=("parallel",)),
    )(x_rows, t_packed)

    # (N, Ho, Wo*Cout) -> (N, Ho, Wo, Cout) -> NCHW to match the PyTorch module.
    out_nhwc = out_flat.reshape(N, Ho, Wo, out_channels)
    return jnp.transpose(out_nhwc, (0, 3, 1, 2))


if __name__ == "__main__":
    # Module configuration (kernel_size=3, stride=1, padding=1, groups=1, bias=True)
    in_channels, out_channels, kernel_size, padding = 4, 8, 3, 1
    N, H, W = 2, 16, 16

    key = jax.random.PRNGKey(0)
    kx, kf, kb = jax.random.split(key, 3)
    sobel_weight = jnp.asarray(make_sobel_weight(out_channels, in_channels, kernel_size))
    sobel_factor = 0.5 + jax.random.uniform(kf, (out_channels, 1, 1, 1), dtype=jnp.float32)
    bias = 0.1 * jax.random.normal(kb, (out_channels,), dtype=jnp.float32)

    # Deterministic input (NCHW, like PyTorch)
    x = jax.random.normal(kx, (N, in_channels, H, W), dtype=jnp.float32)

    # One-time build of the packed weight (hoisted out of the per-call path;
    # rebuild only when sobel_factor / bias / W / padding change).
    t_packed = build_sobel_packed_weight(
        sobel_weight, sobel_factor, bias,
        width=W, kernel_size=kernel_size, padding=padding)
    t_packed = jax.block_until_ready(t_packed)

    out = sobel_conv2d_forward(x, t_packed, out_channels=out_channels,
                               kernel_size=kernel_size, padding=padding)
    out = jax.block_until_ready(out)

    # Pure-JAX reference (F.conv2d equivalent) for correctness check.
    ref = lax.conv_general_dilated(
        x, sobel_weight * sobel_factor,
        window_strides=(1, 1), padding=((padding, padding), (padding, padding)),
        dimension_numbers=("NCHW", "OIHW", "NCHW"),
    ) + bias.reshape(1, -1, 1, 1)
    np.testing.assert_allclose(np.asarray(out), np.asarray(ref), rtol=1e-5, atol=1e-4)

    assert out.shape == (N, out_channels, H, W)
    print("KERNEL_OK")
</pallas_src>

<mosaic_0001>
module attributes {stable_mosaic.version = 11 : i64} {
  func.func @_sobel_gemm_kernel(%arg0: i32, %arg1: memref<1x16x217xf32, #tpu.memory_space<vmem>>, %arg2: memref<217x128xf32, #tpu.memory_space<vmem>>, %arg3: memref<1x16x128xf32, #tpu.memory_space<vmem>>) attributes {dimension_semantics = [#tpu.dimension_semantics<parallel>], iteration_bounds = array<i64: 2>, scalar_prefetch = 0 : i64, scratch_operands = 0 : i64, tpu.core_type = #tpu.core_type<tc>, window_params = [{transform_indices = @transform_0, window_bounds = array<i64: 1, 16, 217>}, {pipeline_mode = #tpu.pipeline_mode<synchronous>, transform_indices = @transform_1, window_bounds = array<i64: 217, 128>}, {transform_indices = @transform_2, window_bounds = array<i64: 1, 16, 128>}]} {
    %c0 = arith.constant 0 : index
    %c0_0 = arith.constant 0 : index
    %c0_1 = arith.constant 0 : index
    %0 = vector.load %arg1[%c0, %c0_0, %c0_1] : memref<1x16x217xf32, #tpu.memory_space<vmem>>, vector<1x16x217xf32>
    %1 = vector.shape_cast %0 : vector<1x16x217xf32> to vector<16x217xf32>
    %c0_2 = arith.constant 0 : index
    %c0_3 = arith.constant 0 : index
    %2 = vector.load %arg2[%c0_2, %c0_3] : memref<217x128xf32, #tpu.memory_space<vmem>>, vector<217x128xf32>
    %cst = arith.constant dense<0.000000e+00> : vector<16x128xf32>
    %3 = tpu.matmul %1, %2, %cst {dimension_numbers = #tpu.dot_dimension_numbers<[1], [0], [0], [1], [0, 0, 1, 1], [], []>} : vector<16x217xf32>, vector<217x128xf32>, vector<16x128xf32> -> vector<16x128xf32>
    %c0_4 = arith.constant 0 : index
    %c0_5 = arith.constant 0 : index
    %c0_6 = arith.constant 0 : index
    %4 = vector.load %arg3[%c0_4, %c0_5, %c0_6] : memref<1x16x128xf32, #tpu.memory_space<vmem>>, vector<1x16x128xf32>
    %5 = vector.shape_cast %4 : vector<1x16x128xf32> to vector<16x128xf32>
    %6 = vector.shape_cast %3 : vector<16x128xf32> to vector<1x16x128xf32>
    tpu.vector_store %arg3[%c0_4, %c0_5, %c0_6], %6 {strides = array<i32>} : memref<1x16x128xf32, #tpu.memory_space<vmem>>, vector<1x16x128xf32>,
    return
  }
  func.func @transform_0(%arg0: i32) -> (i32, i32, i32) {
    %c0_i32 = arith.constant 0 : i32
    %c0_i32_0 = arith.constant 0 : i32
    %c0_i32_1 = arith.constant 0 : i32
    return %arg0, %c0_i32, %c0_i32_0 : i32, i32, i32
  }
  func.func @transform_1(%arg0: i32) -> (i32, i32) {
    %c0_i32 = arith.constant 0 : i32
    %c0_i32_0 = arith.constant 0 : i32
    %c0_i32_1 = arith.constant 0 : i32
    return %c0_i32, %c0_i32_0 : i32, i32
  }
  func.func @transform_2(%arg0: i32) -> (i32, i32, i32) {
    %c0_i32 = arith.constant 0 : i32
    %c0_i32_0 = arith.constant 0 : i32
    %c0_i32_1 = arith.constant 0 : i32
    return %arg0, %c0_i32, %c0_i32_0 : i32, i32, i32
  }
}

</mosaic_0001>

<llo_original>
// kernel: sobel_conv2d_forward.1
$region0: #{sobel_conv2d_forward.1}
  #allocation0 [shape = 'u32[]', space=smem, size = 0x4, offset = 0x4, fixed_abs, tag = 'smem constant byte address 0x4 - core index']
  #allocation1 [shape = 'u32[144,128]{1,0:T(1,128)}', space=vmem, size = 0x12000, scoped, tag = 'internal scratch']
  %s0 = inlined_call_operand.vmem [shape: f32[2,16,217], index: 0, kind: input, shape index: {}]
  %s1 = inlined_call_operand.vmem [shape: f32[217,128], index: 1, kind: input, shape index: {}]
  %s2 = inlined_call_operand.vmem [shape: f32[2,16,128], index: 2, kind: output, shape index: {}]
  %s3 = sld [smem:[#allocation0]]
  $region41: #{sobel_conv2d_forward.1} parent=0
    _
  %s5 = ssub.s32 1, %s3
  %s6 = scalar_select 0, %s5, %s3
  loop: start=0, step=1, limit=4
  $region2: #{sobel_conv2d_forward.1} parent=0 // loop_pre_header
    _
  $region3: #{sobel_conv2d_forward.1} parent=0 // loop_header
    %s8 = sphi 0, %s12
    %p9 = scmp.ge.s32.totalorder %s8, 4
    %s18 = sphi 0, %s20
    %s21 = sphi 0, %s18
    %s22 = sphi 0, %s21
    %s38 = sphi 0, %s22
    %s42 = sphi 0, %s42
    %s44 = sphi 0, %s42
    %s45 = sphi 0, %s44
    %s59 = sphi 0, %s45
    %s65 = sphi 0, %s67
    %s68 = sphi 0, %s65
    %s69 = sphi 0, %s68
    %s85 = sphi 0, %s69
  $region4: #{sobel_conv2d_forward.1} parent=0 // loop_header_branch
    %11 = sbr.rel (%p9) target = $region8
  $region5: #{sobel_conv2d_forward.1} parent=0 // loop_body
    %s13 = ssub.s32 %s8, 1
    %s14 = ssub.s32 %s8, 2
    %s15 = sadd.s32 %s8, 1
    %s16 = ssub.s32 %s8, %s15
    %p17 = scmp.eq.s32.totalorder %s16, 0
    %s19 = sadd.s32 %s18, 1
    %s20 = scalar_select %p17, %s18, %s19
    %p23 = pneg %p17
    %p24 = scmp.eq.s32.totalorder %s8, 1
    %p25 = por %p23, %p24
    %p26 = scmp.ne.s32.totalorder %s18, %s21
    %p27 = scmp.eq.s32.totalorder %s8, 0
    %p28 = por %p26, %p27
    %p29 = scmp.ne.s32.totalorder %s18, %s21
    %p30 = scmp.eq.s32.totalorder %s13, 1
    %p31 = por %p29, %p30
    %p32 = scmp.ne.s32.totalorder %s21, %s22
    %p33 = scmp.eq.s32.totalorder %s13, 0
    %p34 = por %p32, %p33
    %p35 = scmp.ne.s32.totalorder %s21, %s22
    %p36 = scmp.eq.s32.totalorder %s14, 1
    %p37 = por %p35, %p36
    %p39 = scmp.ne.s32.totalorder %s22, %s38
    %p40 = scmp.eq.s32.totalorder %s14, 0
    %p41 = por %p39, %p40
    %s43 = sadd.s32 %s42, 1
    %p46 = scmp.eq.s32.totalorder %s8, 1
    %p47 = scmp.ne.s32.totalorder %s42, %s44
    %p48 = scmp.eq.s32.totalorder %s8, 0
    %p49 = por %p47, %p48
    %p50 = scmp.ne.s32.totalorder %s42, %s44
    %p51 = scmp.eq.s32.totalorder %s13, 1
    %p52 = por %p50, %p51
    %p53 = scmp.ne.s32.totalorder %s44, %s45
    %p54 = scmp.eq.s32.totalorder %s13, 0
    %p55 = por %p53, %p54
    %p56 = scmp.ne.s32.totalorder %s44, %s45
    %p57 = scmp.eq.s32.totalorder %s14, 1
    %p58 = por %p56, %p57
    %p60 = scmp.ne.s32.totalorder %s45, %s59
    %p61 = scmp.eq.s32.totalorder %s14, 0
    %p62 = por %p60, %p61
    %s63 = ssub.s32 %s8, %s15
    %p64 = scmp.eq.s32.totalorder %s63, 0
    %s66 = sadd.s32 %s65, 1
    %s67 = scalar_select %p64, %s65, %s66
    %p70 = pneg %p64
    %p71 = scmp.eq.s32.totalorder %s8, 1
    %p72 = por %p70, %p71
    %p73 = scmp.ne.s32.totalorder %s65, %s68
    %p74 = scmp.eq.s32.totalorder %s8, 0
    %p75 = por %p73, %p74
    %p76 = scmp.ne.s32.totalorder %s65, %s68
    %p77 = scmp.eq.s32.totalorder %s13, 1
    %p78 = por %p76, %p77
    %p79 = scmp.ne.s32.totalorder %s68, %s69
    %p80 = scmp.eq.s32.totalorder %s13, 0
    %p81 = por %p79, %p80
    %p82 = scmp.ne.s32.totalorder %s68, %s69
    %p83 = scmp.eq.s32.totalorder %s14, 1
    %p84 = por %p82, %p83
    %p86 = scmp.ne.s32.totalorder %s69, %s85
    %p87 = scmp.eq.s32.totalorder %s14, 0
    %p88 = por %p86, %p87
    %p89 = scmp.le.s32.totalorder 1, %s8
    %p90 = scmp.lt.s32.totalorder %s8, 3
    %p91 = pnand %p89, %p90
    %p92 = pneg %p91
    // Predicated region
    $region9: #{sobel_conv2d_forward.1} parent=5 // pred_check
      _
    $region10: #{sobel_conv2d_forward.1} parent=5 // pred_check_branch
      %94 = sbr.rel (%p91) target = $region12
    $region11: #{sobel_conv2d_forward.1} parent=5 // pred_region
      %s95 = ssub.s32 %s8, 1
      // Predicated region
      $region13: #{sobel_conv2d_forward.1} parent=11 // pred_check
        %p96 = pneg %p55
      $region14: #{sobel_conv2d_forward.1} parent=11 // pred_check_branch
        %98 = sbr.rel (%p96) target = $region16
      $region15: #{sobel_conv2d_forward.1} parent=11 // pred_region
        _
      $region16: #{sobel_conv2d_forward.1} parent=11 // pred_fallthru
        _
    $region12: #{sobel_conv2d_forward.1} parent=5 // pred_fallthru
      _
    %p99 = scmp.lt.s32.totalorder %s8, 2
    // Predicated region
    $region17: #{sobel_conv2d_forward.1} parent=5 // pred_check
      %p100 = pneg %p99
    $region18: #{sobel_conv2d_forward.1} parent=5 // pred_check_branch
      %102 = sbr.rel (%p100) target = $region20
    $region19: #{sobel_conv2d_forward.1} parent=5 // pred_region
      // Predicated region
      $region21: #{sobel_conv2d_forward.1} parent=19 // pred_check
        %p103 = pneg %p28
      $region22: #{sobel_conv2d_forward.1} parent=19 // pred_check_branch
        %105 = sbr.rel (%p103) target = $region24
      $region23: #{sobel_conv2d_forward.1} parent=19 // pred_region
        %p106 = scmp.lt.s32.totalorder %s8, 1
        %s107 = scalar_select %p106, %s8, 1
        %s108 = smul.addr %s107, 4
        %s109 = smul.addr %s108, 8
        %s110 = scalar_lea.vmem %s0, %s109
      $region24: #{sobel_conv2d_forward.1} parent=19 // pred_fallthru
        _
    $region20: #{sobel_conv2d_forward.1} parent=5 // pred_fallthru
      _
    %p111 = scmp.le.s32.totalorder 1, %s8
    %p112 = scmp.lt.s32.totalorder %s8, 3
    %p113 = pnand %p111, %p112
    %p114 = pneg %p113
    // Predicated region
    $region25: #{sobel_conv2d_forward.1} parent=5 // pred_check
      _
    $region26: #{sobel_conv2d_forward.1} parent=5 // pred_check_branch
      %116 = sbr.rel (%p113) target = $region28
    $region27: #{sobel_conv2d_forward.1} parent=5 // pred_region
      %s117 = ssub.s32 %s8, 1
      %p118 = scmp.lt.s32.totalorder %s13, 1
      %s119 = scalar_select %p118, %s13, 1
      %s120 = smul.addr %s119, 4
      %s121 = smul.addr %s120, 8
      %s122 = scalar_lea.vmem %s0, %s121
      %p123 = pneg %p34
      %p124 = pneg %p31
      %p125 = pneg %p55
      %p126 = pneg %p52
      %p127 = pneg %p81
      %p128 = pneg %p78
      %p129 = scmp.lt.s32.totalorder %s13, 1
      %s130 = scalar_select %p129, %s13, 1
      %s131 = smul.addr %s130, 2
      %s132 = smul.addr %s131, 8
      %s133 = scalar_lea.vmem %s2, %s132
      %p134 = scmp.lt.s32.totalorder %s13, 1
      %s135 = scalar_select %p134, %s13, 1
      %s136 = smul.addr %s135, 4
      %s137 = smul.addr %s136, 8
      %s138 = scalar_lea.vmem %s0, %s137
      %p139 = scmp.lt.s32.totalorder %s13, 1
      %s140 = scalar_select %p139, %s13, 1
      %s141 = smul.addr %s140, 2
      %s142 = smul.addr %s141, 8
      %s143 = scalar_lea.vmem %s2, %s142
      %v144 = vld [vmem:[%s138] sm:$0xff]
      %v145 = vld [vmem:[%s138 + $0x8] sm:$0xff]
      %v146 = vld [vmem:[%s138 + $0x10] sm:$0xff]
      %v147 = vld [vmem:[%s138 + $0x18] sm:$0xff]
      %v148 = vld [vmem:[%s1] sm:$0xff]
      %v149 = vld [vmem:[%s1 + $0x8] sm:$0xff]
      %v150 = vld [vmem:[%s1 + $0x10] sm:$0xff]
      %v151 = vld [vmem:[%s1 + $0x18] sm:$0xff]
      %v152 = vld [vmem:[%s1 + $0x20] sm:$0xff]
      %v153 = vld [vmem:[%s1 + $0x28] sm:$0xff]
      %v154 = vld [vmem:[%s1 + $0x30] sm:$0xff]
      %v155 = vld [vmem:[%s1 + $0x38] sm:$0xff]
      %v156 = vld [vmem:[%s1 + $0x40] sm:$0xff]
      %v157 = vld [vmem:[%s1 + $0x48] sm:$0xff]
      %v158 = vld [vmem:[%s1 + $0x50] sm:$0xff]
      %v159 = vld [vmem:[%s1 + $0x58] sm:$0xff]
      %v160 = vld [vmem:[%s1 + $0x60] sm:$0xff]
      %v161 = vld [vmem:[%s1 + $0x68] sm:$0xff]
      %v162 = vld [vmem:[%s1 + $0x70] sm:$0xff]
      %v163 = vld [vmem:[%s1 + $0x78] sm:$0xff]
      %v164 = vld [vmem:[%s1 + $0x80] sm:$0xff]
      %v165 = vld [vmem:[%s1 + $0x88] sm:$0xff]
      %v166 = vld [vmem:[%s1 + $0x90] sm:$0xff]
      %v167 = vld [vmem:[%s1 + $0x98] sm:$0xff]
      %v168 = vld [vmem:[%s1 + $0xa0] sm:$0xff]
      %v169 = vld [vmem:[%s1 + $0xa8] sm:$0xff]
      %v170 = vld [vmem:[%s1 + $0xb0] sm:$0xff]
      %v171 = vld [vmem:[%s1 + $0xb8] sm:$0xff]
      %v172 = vld [vmem:[%s1 + $0xc0] sm:$0xff]
      %v173 = vld [vmem:[%s1 + $0xc8] sm:$0xff]
      %v174 = vld [vmem:[%s1 + $0xd0] sm:$0xff]
      %v175 = vld [vmem:[%s1 + $0xd8] sm:$0x1]
      %vm176 = vcmask 728064
      %v178 = vsel %vm176, %v145, 0
      %v181 = vsel %vm176, %v147, 0
      %vm183 = vcmask 1040384
      %v185 = vsel %vm183, %v175, 0
      %187 = vmatprep.subr.mxu0 0.0
      %188 = vmatpush1.msra.mxu0 %v148
      %189 = vmatprep.subr.mxu0 0.0
      %190 = vmatpush1.msra.mxu0 %v149
      %191 = vmatprep.subr.mxu0 0.0
      %192 = vmatpush1.msra.mxu0 %v150
      %193 = vmatprep.subr.mxu0 0.0
      %194 = vmatpush1.msra.mxu0 %v151
      %195 = vmatprep.subr.mxu0 0.0
      %196 = vmatpush1.msra.mxu0 %v152
      %197 = vmatprep.subr.mxu0 0.0
      %198 = vmatpush1.msra.mxu0 %v153
      %199 = vmatprep.subr.mxu0 0.0
      %200 = vmatpush1.msra.mxu0 %v154
      %201 = vmatprep.subr.mxu0 0.0
      %202 = vmatpush1.msra.mxu0 %v155
      %203 = vmatprep.subr.mxu0 0.0
      %204 = vmatpush1.msra.mxu0 %v156
      %205 = vmatprep.subr.mxu0 0.0
      %206 = vmatpush1.msra.mxu0 %v157
      %207 = vmatprep.subr.mxu0 0.0
      %208 = vmatpush1.msra.mxu0 %v158
      %209 = vmatprep.subr.mxu0 0.0
      %210 = vmatpush1.msra.mxu0 %v159
      %211 = vmatprep.subr.mxu0 0.0
      %212 = vmatpush1.msra.mxu0 %v160
      %213 = vmatprep.subr.mxu0 0.0
      %214 = vmatpush1.msra.mxu0 %v161
      %215 = vmatprep.subr.mxu0 0.0
      %216 = vmatpush1.msra.mxu0 %v162
      %217 = vmatprep.subr.mxu0 0.0
      %218 = vmatpush1.msra.mxu0 %v163
      %219 = vmatprep.subr.mxu0 0.0
      %220 = vmatpush1.msra.mxu0 %v164
      %221 = vmatprep.subr.mxu0 0.0
      %222 = vmatpush1.msra.mxu0 %v165
      %223 = vmatprep.subr.mxu0 0.0
      %224 = vmatpush1.msra.mxu0 %v166
      %225 = vmatprep.subr.mxu0 0.0
      %226 = vmatpush1.msra.mxu0 %v167
      %227 = vmatprep.subr.mxu0 0.0
      %228 = vmatpush1.msra.mxu0 %v168
      %229 = vmatprep.subr.mxu0 0.0
      %230 = vmatpush1.msra.mxu0 %v169
      %231 = vmatprep.subr.mxu0 0.0
      %232 = vmatpush1.msra.mxu0 %v170
      %233 = vmatprep.subr.mxu0 0.0
      %234 = vmatpush1.msra.mxu0 %v171
      %235 = vmatprep.subr.mxu0 0.0
      %236 = vmatpush1.msra.mxu0 %v172
      %237 = vmatprep.subr.mxu0 0.0
      %238 = vmatpush1.msra.mxu0 %v173
      %239 = vmatprep.subr.mxu0 0.0
      %240 = vmatpush1.msra.mxu0 %v174
      %241 = vmatprep.subr.mxu0 0.0
      %242 = vmatpush1.msra.mxu0 %v185
      %243 = vmatprep.subr.mxu0 0.0
      %244 = vmatpush1.msra.mxu0 0.0
      %245 = vmatprep.subr.mxu0 0.0
      %246 = vmatpush1.msra.mxu0 0.0
      %247 = vmatprep.subr.mxu0 0.0
      %248 = vmatpush1.msra.mxu0 0.0
      %249 = vmatprep.subr.mxu0 0.0
      %250 = vmatpush1.msra.mxu0 0.0
      %251 = vmatprep.mubr.f32.mxu0 %v178
      %252 = vmatmul.mubr.f32.gmra.mrb[0].mxu0 %v144
      %v253 = vpop.f32.mrb[0].mxu0
      %v254 = vadd.f32 0.0, %v253
      %v255 = vpop.f32.mrb[0].mxu0
      %256 = vmatprep.mubr.f32.mxu0 %v181
      %257 = vmatmul.mubr.f32.gmra.mrb[0].mxu0 %v146
      %v258 = vpop.f32.mrb[0].mxu0
      %v259 = vadd.f32 0.0, %v258
      %v260 = vpop.f32.mrb[0].mxu0
      %261 = vdwg.mxu0
      %262 = vst [vmem:[%s143] sm:$0xff] %v254
      %263 = vst [vmem:[%s143 + $0x8] sm:$0xff] %v259
      %p264 = scmp.lt.s32.totalorder %s13, 1
      %s265 = scalar_select %p264, %s13, 1
      %s266 = smul.addr %s265, 2
      %s267 = smul.addr %s266, 8
      %s268 = scalar_lea.vmem %s2, %s267
      // Predicated region
      $region29: #{sobel_conv2d_forward.1} parent=27 // pred_check
        %p269 = pneg %p78
      $region30: #{sobel_conv2d_forward.1} parent=27 // pred_check_branch
        %271 = sbr.rel (%p269) target = $region32
      $region31: #{sobel_conv2d_forward.1} parent=27 // pred_region
        _
      $region32: #{sobel_conv2d_forward.1} parent=27 // pred_fallthru
        _
    $region28: #{sobel_conv2d_forward.1} parent=5 // pred_fallthru
      _
    %p272 = scmp.le.s32.totalorder 2, %s8
    // Predicated region
    $region33: #{sobel_conv2d_forward.1} parent=5 // pred_check
      %p273 = pneg %p272
    $region34: #{sobel_conv2d_forward.1} parent=5 // pred_check_branch
      %275 = sbr.rel (%p273) target = $region36
    $region35: #{sobel_conv2d_forward.1} parent=5 // pred_region
      %s276 = ssub.s32 %s8, 2
      // Predicated region
      $region37: #{sobel_conv2d_forward.1} parent=35 // pred_check
        %p277 = pneg %p84
      $region38: #{sobel_conv2d_forward.1} parent=35 // pred_check_branch
        %279 = sbr.rel (%p277) target = $region40
      $region39: #{sobel_conv2d_forward.1} parent=35 // pred_region
        %p280 = scmp.lt.s32.totalorder %s14, 1
        %s281 = scalar_select %p280, %s14, 1
        %s282 = smul.addr %s281, 2
        %s283 = smul.addr %s282, 8
        %s284 = scalar_lea.vmem %s2, %s283
      $region40: #{sobel_conv2d_forward.1} parent=35 // pred_fallthru
        _
    $region36: #{sobel_conv2d_forward.1} parent=5 // pred_fallthru
      _
  $region6: #{sobel_conv2d_forward.1} parent=0 // loop_footer
    %s12 = sadd.s32 1, %s8
  $region7: #{sobel_conv2d_forward.1} parent=0 // loop_footer_branch
    %7 = sbr.rel target = $region3
  $region8: #{sobel_conv2d_forward.1} parent=0 // loop_exit
    _

</llo_original>
